<compile_context>
chip_gen: v7x
topology: tpu7x:2x2x1
jax: 0.10.0
libtpu: 0.0.40
codegen_flags: <defaults>
</compile_context>

<pallas_src>
import jax
import jax.numpy as jnp
from jax import lax
from jax.experimental import pallas as pl
from jax.experimental.pallas import tpu as pltpu  # noqa: F401  (imported per harness convention)

# Small shapes consistent with the module's forward (6-channel input, 3/3 split).
B = 2
H = W = 16
CIN = 3                      # channels per branch
COUT = 32                    # backbone conv channels == fc.in_features
KH = KW = 3
KDIM = KH * KW * CIN         # 27 real contraction columns (NOT padded in HBM)
M = 2 * B * H * W            # 1024 rows: both shared-weight branches merged


def fused_backbone_kernel(patch_ref, wconv_ref, bconv_ref, pool_ref, feat_ref):
    """Both branches of the shared backbone in one shot.

    patch_ref : (M, KDIM)    bf16 im2col patches for branch1 rows then branch2 rows
    wconv_ref : (KDIM, COUT) bf16 shared conv weight
    bconv_ref : (1, COUT)    f32 conv bias
    pool_ref  : (2B, M)      bf16 block-diagonal mean-pool matrix (1/(H*W) folded in)
    feat_ref  : (2B, COUT)   f32 pooled backbone features [f1(b0), f1(b1), f2(b0), f2(b1)]
    """
    # 3x3 "same" conv for BOTH branches == one im2col matmul on the MXU
    # (bf16 inputs, f32 accumulation).
    y = jnp.dot(patch_ref[...], wconv_ref[...],
                preferred_element_type=jnp.float32)            # (M, COUT) f32
    # Bias + ReLU epilogue kept in f32 (v5e VPU has no bf16 ALU path).
    y = jnp.maximum(y + bconv_ref[...], 0.0)
    # Global average pool as a second small MXU matmul (lane-dense K=1024
    # contraction instead of a lane-sparse sublane reduction).
    feat_ref[...] = jnp.dot(pool_ref[...], y.astype(jnp.bfloat16),
                            preferred_element_type=jnp.float32)  # (2B, COUT)


@jax.jit
def double_net_forward(x_nchw, params):
    """x_nchw: (B, 6, H, W) float32 -> (B, 1) float32 logits."""
    wconv, bconv, wfc, bfc = params
    x_nhwc = jnp.transpose(x_nchw, (0, 2, 3, 1))               # (B, H, W, 6)
    # Merge the two branches along the batch axis: rows [br1_b0, br1_b1, br2_b0, br2_b1].
    xb = jnp.concatenate([x_nhwc[..., :CIN], x_nhwc[..., CIN:]], axis=0)  # (2B, H, W, CIN)
    xp = jnp.pad(xb, ((0, 0), (1, 1), (1, 1), (0, 0)))         # "same" padding for 3x3

    # im2col (fuses into one producer op under jit); order (kh, kw, c) matches
    # wconv.reshape(KDIM, COUT).
    cols = [xp[:, kh:kh + H, kw:kw + W, :] for kh in range(KH) for kw in range(KW)]
    patches = jnp.concatenate(cols, axis=-1).reshape(M, KDIM).astype(jnp.bfloat16)

    wmat = wconv.reshape(KDIM, COUT).astype(jnp.bfloat16)      # (27, COUT)
    bconv_f32 = bconv.astype(jnp.float32)                      # (1, COUT)

    # Block-diagonal mean-pool matrix: row r averages y rows r*H*W .. r*H*W+H*W-1.
    pool = (jnp.repeat(jnp.eye(2 * B, dtype=jnp.float32), H * W, axis=1)
            * (1.0 / (H * W))).astype(jnp.bfloat16)            # (2B, M)

    # Single grid-less pallas_call: every operand is one full-extent VMEM block.
    feat = pl.pallas_call(
        fused_backbone_kernel,
        out_shape=jax.ShapeDtypeStruct((2 * B, COUT), jnp.float32),
    )(patches, wmat, bconv_f32, pool)

    # DoubleNet tail: concat([f1, f2], dim=1) -> fc. Tiny; left to XLA fusion.
    f = jnp.concatenate([feat[:B], feat[B:]], axis=1)          # (B, 2*COUT)
    return f @ wfc + bfc                                       # (B, 1) logits


def double_net_predict(x_nchw, params):
    # predict() in the module is just sigmoid(forward(x)); trivial glue in JAX.
    return jax.nn.sigmoid(double_net_forward(x_nchw, params))


def double_net_reference(x_nchw, params):
    """Pure-JAX f32 reference for correctness checking."""
    wconv, bconv, wfc, bfc = params
    w4 = wconv.reshape(KH, KW, CIN, COUT)

    def backbone(xb):                                          # (B, H, W, CIN) NHWC
        y = lax.conv_general_dilated(
            xb, w4, window_strides=(1, 1), padding="SAME",
            dimension_numbers=("NHWC", "HWIO", "NHWC"))
        y = jnp.maximum(y + bconv.reshape(1, 1, 1, COUT), 0.0)
        return jnp.mean(y, axis=(1, 2))                        # (B, COUT)

    x_nhwc = jnp.transpose(x_nchw, (0, 2, 3, 1))
    f = jnp.concatenate([backbone(x_nhwc[..., :CIN]),
                         backbone(x_nhwc[..., CIN:])], axis=1)
    return f @ wfc + bfc


if __name__ == "__main__":
    key = jax.random.PRNGKey(0)
    k1, k2, k3, k4, kx = jax.random.split(key, 5)

    # Deterministic synthetic parameters (shared backbone + DoubleNet fc).
    wconv = jax.random.normal(k1, (KH * KW, CIN, COUT), jnp.float32) * 0.1
    bconv = jax.random.normal(k2, (1, COUT), jnp.float32) * 0.1
    wfc   = jax.random.normal(k3, (2 * COUT, 1), jnp.float32) * 0.1
    bfc   = jax.random.normal(k4, (1, 1), jnp.float32) * 0.1
    params = (wconv, bconv, wfc, bfc)

    # 6-channel NCHW input (DoubleNet splits it 3 / 3 between the branches).
    x = jax.random.normal(kx, (B, 2 * CIN, H, W), jnp.float32)

    out = jax.block_until_ready(double_net_forward(x, params))
    ref = jax.block_until_ready(double_net_reference(x, params))

    assert out.shape == (B, 1), out.shape
    # bf16 MXU inputs with f32 accumulation: tolerance relaxed per review.
    assert jnp.allclose(out, ref, atol=2e-2, rtol=2e-2), (out, ref)

    print("KERNEL_OK")
</pallas_src>

<mosaic_0001>
module attributes {stable_mosaic.version = 11 : i64} {
  func.func @fused_backbone_kernel(%arg0: memref<1024x27xbf16, #tpu.memory_space<vmem>>, %arg1: memref<27x32xbf16, #tpu.memory_space<vmem>>, %arg2: memref<1x32xf32, #tpu.memory_space<vmem>>, %arg3: memref<4x1024xbf16, #tpu.memory_space<vmem>>, %arg4: memref<4x32xf32, #tpu.memory_space<vmem>>) attributes {dimension_semantics = [], scalar_prefetch = 0 : i64, scratch_operands = 0 : i64, tpu.core_type = #tpu.core_type<tc>} {
    %c0 = arith.constant 0 : index
    %c0_0 = arith.constant 0 : index
    %0 = vector.load %arg0[%c0, %c0_0] : memref<1024x27xbf16, #tpu.memory_space<vmem>>, vector<1024x27xbf16>
    %c0_1 = arith.constant 0 : index
    %c0_2 = arith.constant 0 : index
    %1 = vector.load %arg1[%c0_1, %c0_2] : memref<27x32xbf16, #tpu.memory_space<vmem>>, vector<27x32xbf16>
    %cst = arith.constant dense<0.000000e+00> : vector<1024x32xf32>
    %2 = tpu.matmul %0, %1, %cst {dimension_numbers = #tpu.dot_dimension_numbers<[1], [0], [0], [1], [0, 0, 1, 1], [], []>} : vector<1024x27xbf16>, vector<27x32xbf16>, vector<1024x32xf32> -> vector<1024x32xf32>
    %c0_3 = arith.constant 0 : index
    %c0_4 = arith.constant 0 : index
    %3 = vector.load %arg2[%c0_3, %c0_4] : memref<1x32xf32, #tpu.memory_space<vmem>>, vector<1x32xf32>
    %4 = vector.broadcast %3 : vector<1x32xf32> to vector<1024x32xf32>
    %5 = arith.addf %2, %4 : vector<1024x32xf32>
    %cst_5 = arith.constant 0.000000e+00 : f32
    %6 = vector.broadcast %cst_5 : f32 to vector<1024x32xf32>
    %7 = arith.maximumf %5, %6 : vector<1024x32xf32>
    %c0_6 = arith.constant 0 : index
    %c0_7 = arith.constant 0 : index
    %8 = vector.load %arg3[%c0_6, %c0_7] : memref<4x1024xbf16, #tpu.memory_space<vmem>>, vector<4x1024xbf16>
    %9 = arith.truncf %7 : vector<1024x32xf32> to vector<1024x32xbf16>
    %cst_8 = arith.constant dense<0.000000e+00> : vector<4x32xf32>
    %10 = tpu.matmul %8, %9, %cst_8 {dimension_numbers = #tpu.dot_dimension_numbers<[1], [0], [0], [1], [0, 0, 1, 1], [], []>} : vector<4x1024xbf16>, vector<1024x32xbf16>, vector<4x32xf32> -> vector<4x32xf32>
    %c0_9 = arith.constant 0 : index
    %c0_10 = arith.constant 0 : index
    %11 = vector.load %arg4[%c0_9, %c0_10] : memref<4x32xf32, #tpu.memory_space<vmem>>, vector<4x32xf32>
    tpu.vector_store %arg4[%c0_9, %c0_10], %10 {strides = array<i32>} : memref<4x32xf32, #tpu.memory_space<vmem>>, vector<4x32xf32>,
    return
  }
}

</mosaic_0001>

<llo_original>
// kernel: double_net_forward.1
$region0: #{double_net_forward.1}
  #allocation0 [shape = 'u32[]', space=smem, size = 0x4, offset = 0x4, fixed_abs, tag = 'smem constant byte address 0x4 - core index']
  #allocation1 [shape = 'u32[144,128]{1,0:T(1,128)}', space=vmem, size = 0x12000, scoped, tag = 'internal scratch']
  %s0 = inlined_call_operand.vmem [shape: bf16[1024,27], index: 0, kind: input, shape index: {}]
  %s1 = inlined_call_operand.vmem [shape: bf16[27,32], index: 1, kind: input, shape index: {}]
  %s2 = inlined_call_operand.vmem [shape: f32[1,32], index: 2, kind: input, shape index: {}]
  %s3 = inlined_call_operand.vmem [shape: bf16[4,1024], index: 3, kind: input, shape index: {}]
  %s4 = inlined_call_operand.vmem [shape: f32[4,32], index: 4, kind: output, shape index: {}]
  %s5 = sld [smem:[#allocation0]]
  $region26: #{double_net_forward.1} parent=0
    _
  %s7 = ssub.s32 1, %s5
  %s8 = scalar_select 0, %s7, %s5
  // Predicated region
  $region2: #{double_net_forward.1} parent=0 // pred_check
    _
  $region3: #{double_net_forward.1} parent=0 // pred_check_branch
    %10 = sbr.rel (0) target = $region5
  $region4: #{double_net_forward.1} parent=0 // pred_region
    _
  $region5: #{double_net_forward.1} parent=0 // pred_fallthru
    _
  // Predicated region
  $region6: #{double_net_forward.1} parent=0 // pred_check
    _
  $region7: #{double_net_forward.1} parent=0 // pred_check_branch
    %12 = sbr.rel (0) target = $region9
  $region8: #{double_net_forward.1} parent=0 // pred_region
    _
  $region9: #{double_net_forward.1} parent=0 // pred_fallthru
    _
  // Predicated region
  $region10: #{double_net_forward.1} parent=0 // pred_check
    _
  $region11: #{double_net_forward.1} parent=0 // pred_check_branch
    %14 = sbr.rel (0) target = $region13
  $region12: #{double_net_forward.1} parent=0 // pred_region
    _
  $region13: #{double_net_forward.1} parent=0 // pred_fallthru
    _
  // Predicated region
  $region14: #{double_net_forward.1} parent=0 // pred_check
    _
  $region15: #{double_net_forward.1} parent=0 // pred_check_branch
    %16 = sbr.rel (0) target = $region17
  $region16: #{double_net_forward.1} parent=0 // pred_region
    _
  $region17: #{double_net_forward.1} parent=0 // pred_fallthru
    _
  %v18 = vld [vmem:[%s0] sm:$0xf]
  %v19 = vld [vmem:[%s0 + $0x4] sm:$0xf]
  %v20 = vld [vmem:[%s0 + $0x8] sm:$0xf]
  %v21 = vld [vmem:[%s0 + $0xc] sm:$0xf]
  %v22 = vld [vmem:[%s0 + $0x10] sm:$0xf]
  %v23 = vld [vmem:[%s0 + $0x14] sm:$0xf]
  %v24 = vld [vmem:[%s0 + $0x18] sm:$0xf]
  %v25 = vld [vmem:[%s0 + $0x1c] sm:$0xf]
  %v26 = vld [vmem:[%s0 + $0x20] sm:$0xf]
  %v27 = vld [vmem:[%s0 + $0x24] sm:$0xf]
  %v28 = vld [vmem:[%s0 + $0x28] sm:$0xf]
  %v29 = vld [vmem:[%s0 + $0x2c] sm:$0xf]
  %v30 = vld [vmem:[%s0 + $0x30] sm:$0xf]
  %v31 = vld [vmem:[%s0 + $0x34] sm:$0xf]
  %v32 = vld [vmem:[%s0 + $0x38] sm:$0xf]
  %v33 = vld [vmem:[%s0 + $0x3c] sm:$0xf]
  %v34 = vld [vmem:[%s0 + $0x40] sm:$0xf]
  %v35 = vld [vmem:[%s0 + $0x44] sm:$0xf]
  %v36 = vld [vmem:[%s0 + $0x48] sm:$0xf]
  %v37 = vld [vmem:[%s0 + $0x4c] sm:$0xf]
  %v38 = vld [vmem:[%s0 + $0x50] sm:$0xf]
  %v39 = vld [vmem:[%s0 + $0x54] sm:$0xf]
  %v40 = vld [vmem:[%s0 + $0x58] sm:$0xf]
  %v41 = vld [vmem:[%s0 + $0x5c] sm:$0xf]
  %v42 = vld [vmem:[%s0 + $0x60] sm:$0xf]
  %v43 = vld [vmem:[%s0 + $0x64] sm:$0xf]
  %v44 = vld [vmem:[%s0 + $0x68] sm:$0xf]
  %v45 = vld [vmem:[%s0 + $0x6c] sm:$0xf]
  %v46 = vld [vmem:[%s0 + $0x70] sm:$0xf]
  %v47 = vld [vmem:[%s0 + $0x74] sm:$0xf]
  %v48 = vld [vmem:[%s0 + $0x78] sm:$0xf]
  %v49 = vld [vmem:[%s0 + $0x7c] sm:$0xf]
  %v50 = vld [vmem:[%s0 + $0x80] sm:$0xf]
  %v51 = vld [vmem:[%s0 + $0x84] sm:$0xf]
  %v52 = vld [vmem:[%s0 + $0x88] sm:$0xf]
  %v53 = vld [vmem:[%s0 + $0x8c] sm:$0xf]
  %v54 = vld [vmem:[%s0 + $0x90] sm:$0xf]
  %v55 = vld [vmem:[%s0 + $0x94] sm:$0xf]
  %v56 = vld [vmem:[%s0 + $0x98] sm:$0xf]
  %v57 = vld [vmem:[%s0 + $0x9c] sm:$0xf]
  %v58 = vld [vmem:[%s0 + $0xa0] sm:$0xf]
  %v59 = vld [vmem:[%s0 + $0xa4] sm:$0xf]
  %v60 = vld [vmem:[%s0 + $0xa8] sm:$0xf]
  %v61 = vld [vmem:[%s0 + $0xac] sm:$0xf]
  %v62 = vld [vmem:[%s0 + $0xb0] sm:$0xf]
  %v63 = vld [vmem:[%s0 + $0xb4] sm:$0xf]
  %v64 = vld [vmem:[%s0 + $0xb8] sm:$0xf]
  %v65 = vld [vmem:[%s0 + $0xbc] sm:$0xf]
  %v66 = vld [vmem:[%s0 + $0xc0] sm:$0xf]
  %v67 = vld [vmem:[%s0 + $0xc4] sm:$0xf]
  %v68 = vld [vmem:[%s0 + $0xc8] sm:$0xf]
  %v69 = vld [vmem:[%s0 + $0xcc] sm:$0xf]
  %v70 = vld [vmem:[%s0 + $0xd0] sm:$0xf]
  %v71 = vld [vmem:[%s0 + $0xd4] sm:$0xf]
  %v72 = vld [vmem:[%s0 + $0xd8] sm:$0xf]
  %v73 = vld [vmem:[%s0 + $0xdc] sm:$0xf]
  %v74 = vld [vmem:[%s0 + $0xe0] sm:$0xf]
  %v75 = vld [vmem:[%s0 + $0xe4] sm:$0xf]
  %v76 = vld [vmem:[%s0 + $0xe8] sm:$0xf]
  %v77 = vld [vmem:[%s0 + $0xec] sm:$0xf]
  %v78 = vld [vmem:[%s0 + $0xf0] sm:$0xf]
  %v79 = vld [vmem:[%s0 + $0xf4] sm:$0xf]
  %v80 = vld [vmem:[%s0 + $0xf8] sm:$0xf]
  %v81 = vld [vmem:[%s0 + $0xfc] sm:$0xf]
  %v82 = vld [vmem:[%s0 + $0x100] sm:$0xf]
  %v83 = vld [vmem:[%s0 + $0x104] sm:$0xf]
  %v84 = vld [vmem:[%s0 + $0x108] sm:$0xf]
  %v85 = vld [vmem:[%s0 + $0x10c] sm:$0xf]
  %v86 = vld [vmem:[%s0 + $0x110] sm:$0xf]
  %v87 = vld [vmem:[%s0 + $0x114] sm:$0xf]
  %v88 = vld [vmem:[%s0 + $0x118] sm:$0xf]
  %v89 = vld [vmem:[%s0 + $0x11c] sm:$0xf]
  %v90 = vld [vmem:[%s0 + $0x120] sm:$0xf]
  %v91 = vld [vmem:[%s0 + $0x124] sm:$0xf]
  %v92 = vld [vmem:[%s0 + $0x128] sm:$0xf]
  %v93 = vld [vmem:[%s0 + $0x12c] sm:$0xf]
  %v94 = vld [vmem:[%s0 + $0x130] sm:$0xf]
  %v95 = vld [vmem:[%s0 + $0x134] sm:$0xf]
  %v96 = vld [vmem:[%s0 + $0x138] sm:$0xf]
  %v97 = vld [vmem:[%s0 + $0x13c] sm:$0xf]
  %v98 = vld [vmem:[%s0 + $0x140] sm:$0xf]
  %v99 = vld [vmem:[%s0 + $0x144] sm:$0xf]
  %v100 = vld [vmem:[%s0 + $0x148] sm:$0xf]
  %v101 = vld [vmem:[%s0 + $0x14c] sm:$0xf]
  %v102 = vld [vmem:[%s0 + $0x150] sm:$0xf]
  %v103 = vld [vmem:[%s0 + $0x154] sm:$0xf]
  %v104 = vld [vmem:[%s0 + $0x158] sm:$0xf]
  %v105 = vld [vmem:[%s0 + $0x15c] sm:$0xf]
  %v106 = vld [vmem:[%s0 + $0x160] sm:$0xf]
  %v107 = vld [vmem:[%s0 + $0x164] sm:$0xf]
  %v108 = vld [vmem:[%s0 + $0x168] sm:$0xf]
  %v109 = vld [vmem:[%s0 + $0x16c] sm:$0xf]
  %v110 = vld [vmem:[%s0 + $0x170] sm:$0xf]
  %v111 = vld [vmem:[%s0 + $0x174] sm:$0xf]
  %v112 = vld [vmem:[%s0 + $0x178] sm:$0xf]
  %v113 = vld [vmem:[%s0 + $0x17c] sm:$0xf]
  %v114 = vld [vmem:[%s0 + $0x180] sm:$0xf]
  %v115 = vld [vmem:[%s0 + $0x184] sm:$0xf]
  %v116 = vld [vmem:[%s0 + $0x188] sm:$0xf]
  %v117 = vld [vmem:[%s0 + $0x18c] sm:$0xf]
  %v118 = vld [vmem:[%s0 + $0x190] sm:$0xf]
  %v119 = vld [vmem:[%s0 + $0x194] sm:$0xf]
  %v120 = vld [vmem:[%s0 + $0x198] sm:$0xf]
  %v121 = vld [vmem:[%s0 + $0x19c] sm:$0xf]
  %v122 = vld [vmem:[%s0 + $0x1a0] sm:$0xf]
  %v123 = vld [vmem:[%s0 + $0x1a4] sm:$0xf]
  %v124 = vld [vmem:[%s0 + $0x1a8] sm:$0xf]
  %v125 = vld [vmem:[%s0 + $0x1ac] sm:$0xf]
  %v126 = vld [vmem:[%s0 + $0x1b0] sm:$0xf]
  %v127 = vld [vmem:[%s0 + $0x1b4] sm:$0xf]
  %v128 = vld [vmem:[%s0 + $0x1b8] sm:$0xf]
  %v129 = vld [vmem:[%s0 + $0x1bc] sm:$0xf]
  %v130 = vld [vmem:[%s0 + $0x1c0] sm:$0xf]
  %v131 = vld [vmem:[%s0 + $0x1c4] sm:$0xf]
  %v132 = vld [vmem:[%s0 + $0x1c8] sm:$0xf]
  %v133 = vld [vmem:[%s0 + $0x1cc] sm:$0xf]
  %v134 = vld [vmem:[%s0 + $0x1d0] sm:$0xf]
  %v135 = vld [vmem:[%s0 + $0x1d4] sm:$0xf]
  %v136 = vld [vmem:[%s0 + $0x1d8] sm:$0xf]
  %v137 = vld [vmem:[%s0 + $0x1dc] sm:$0xf]
  %v138 = vld [vmem:[%s0 + $0x1e0] sm:$0xf]
  %v139 = vld [vmem:[%s0 + $0x1e4] sm:$0xf]
  %v140 = vld [vmem:[%s0 + $0x1e8] sm:$0xf]
  %v141 = vld [vmem:[%s0 + $0x1ec] sm:$0xf]
  %v142 = vld [vmem:[%s0 + $0x1f0] sm:$0xf]
  %v143 = vld [vmem:[%s0 + $0x1f4] sm:$0xf]
  %v144 = vld [vmem:[%s0 + $0x1f8] sm:$0xf]
  %v145 = vld [vmem:[%s0 + $0x1fc] sm:$0xf]
  %v146 = vld [vmem:[%s1] sm:$0xf]
  %v147 = vld [vmem:[%s1 + $0x4] sm:$0xf]
  %v148 = vld [vmem:[%s1 + $0x8] sm:$0xf]
  %v149 = vld [vmem:[%s1 + $0xc] sm:$0x3]
  %v150 = vld [vmem:[%s2] sm:$0x1]
  %v152 = vlaneseq
  %v153 = vshrl.u32 %v152, 7
  %v154 = vsub.s32 0, %v153
  %v155 = vrot.slane %v150, %v154
  %v285 = vunpack.c.l.b16 %v18
  %v286 = vunpack.c.l.b16 %v19
  %v287 = vunpack.c.l.b16 %v20
  %v288 = vunpack.c.l.b16 %v21
  %v289 = vunpack.c.l.b16 %v22
  %v290 = vunpack.c.l.b16 %v23
  %v291 = vunpack.c.l.b16 %v24
  %v292 = vunpack.c.l.b16 %v25
  %v293 = vunpack.c.l.b16 %v26
  %v294 = vunpack.c.l.b16 %v27
  %v295 = vunpack.c.l.b16 %v28
  %v296 = vunpack.c.l.b16 %v29
  %v297 = vunpack.c.l.b16 %v30
  %v298 = vunpack.c.l.b16 %v31
  %v299 = vunpack.c.l.b16 %v32
  %v300 = vunpack.c.l.b16 %v33
  %v301 = vunpack.c.l.b16 %v34
  %v302 = vunpack.c.l.b16 %v35
  %v303 = vunpack.c.l.b16 %v36
  %v304 = vunpack.c.l.b16 %v37
  %v305 = vunpack.c.l.b16 %v38
  %v306 = vunpack.c.l.b16 %v39
  %v307 = vunpack.c.l.b16 %v40
  %v308 = vunpack.c.l.b16 %v41
  %v309 = vunpack.c.l.b16 %v42
  %v310 = vunpack.c.l.b16 %v43
  %v311 = vunpack.c.l.b16 %v44
  %v312 = vunpack.c.l.b16 %v45
  %v313 = vunpack.c.l.b16 %v46
  %v314 = vunpack.c.l.b16 %v47
  %v315 = vunpack.c.l.b16 %v48
  %v316 = vunpack.c.l.b16 %v49
  %v317 = vunpack.c.l.b16 %v50
  %v318 = vunpack.c.l.b16 %v51
  %v319 = vunpack.c.l.b16 %v52
  %v320 = vunpack.c.l.b16 %v53
  %v321 = vunpack.c.l.b16 %v54
  %v322 = vunpack.c.l.b16 %v55
  %v323 = vunpack.c.l.b16 %v56
  %v324 = vunpack.c.l.b16 %v57
  %v325 = vunpack.c.l.b16 %v58
  %v326 = vunpack.c.l.b16 %v59
  %v327 = vunpack.c.l.b16 %v60
  %v328 = vunpack.c.l.b16 %v61
  %v329 = vunpack.c.l.b16 %v62
  %v330 = vunpack.c.l.b16 %v63
  %v331 = vunpack.c.l.b16 %v64
  %v332 = vunpack.c.l.b16 %v65
  %v333 = vunpack.c.l.b16 %v66
  %v334 = vunpack.c.l.b16 %v67
  %v335 = vunpack.c.l.b16 %v68
  %v336 = vunpack.c.l.b16 %v69
  %v337 = vunpack.c.l.b16 %v70
  %v338 = vunpack.c.l.b16 %v71
  %v339 = vunpack.c.l.b16 %v72
  %v340 = vunpack.c.l.b16 %v73
  %v341 = vunpack.c.l.b16 %v74
  %v342 = vunpack.c.l.b16 %v75
  %v343 = vunpack.c.l.b16 %v76
  %v344 = vunpack.c.l.b16 %v77
  %v345 = vunpack.c.l.b16 %v78
  %v346 = vunpack.c.l.b16 %v79
  %v347 = vunpack.c.l.b16 %v80
  %v348 = vunpack.c.l.b16 %v81
  %v349 = vunpack.c.l.b16 %v82
  %v350 = vunpack.c.l.b16 %v83
  %v351 = vunpack.c.l.b16 %v84
  %v352 = vunpack.c.l.b16 %v85
  %v353 = vunpack.c.l.b16 %v86
  %v354 = vunpack.c.l.b16 %v87
  %v355 = vunpack.c.l.b16 %v88
  %v356 = vunpack.c.l.b16 %v89
  %v357 = vunpack.c.l.b16 %v90
  %v358 = vunpack.c.l.b16 %v91
  %v359 = vunpack.c.l.b16 %v92
  %v360 = vunpack.c.l.b16 %v93
  %v361 = vunpack.c.l.b16 %v94
  %v362 = vunpack.c.l.b16 %v95
  %v363 = vunpack.c.l.b16 %v96
  %v364 = vunpack.c.l.b16 %v97
  %v365 = vunpack.c.l.b16 %v98
  %v366 = vunpack.c.l.b16 %v99
  %v367 = vunpack.c.l.b16 %v100
  %v368 = vunpack.c.l.b16 %v101
  %v369 = vunpack.c.l.b16 %v102
  %v370 = vunpack.c.l.b16 %v103
  %v371 = vunpack.c.l.b16 %v104
  %v372 = vunpack.c.l.b16 %v105
  %v373 = vunpack.c.l.b16 %v106
  %v374 = vunpack.c.l.b16 %v107
  %v375 = vunpack.c.l.b16 %v108
  %v376 = vunpack.c.l.b16 %v109
  %v377 = vunpack.c.l.b16 %v110
  %v378 = vunpack.c.l.b16 %v111
  %v379 = vunpack.c.l.b16 %v112
  %v380 = vunpack.c.l.b16 %v113
  %v381 = vunpack.c.l.b16 %v114
  %v382 = vunpack.c.l.b16 %v115
  %v383 = vunpack.c.l.b16 %v116
  %v384 = vunpack.c.l.b16 %v117
  %v385 = vunpack.c.l.b16 %v118
  %v386 = vunpack.c.l.b16 %v119
  %v387 = vunpack.c.l.b16 %v120
  %v388 = vunpack.c.l.b16 %v121
  %v389 = vunpack.c.l.b16 %v122
  %v390 = vunpack.c.l.b16 %v123
  %v391 = vunpack.c.l.b16 %v124
  %v392 = vunpack.c.l.b16 %v125
  %v393 = vunpack.c.l.b16 %v126
  %v394 = vunpack.c.l.b16 %v127
  %v395 = vunpack.c.l.b16 %v128
  %v396 = vunpack.c.l.b16 %v129
  %v397 = vunpack.c.l.b16 %v130
  %v398 = vunpack.c.l.b16 %v131
  %v399 = vunpack.c.l.b16 %v132
  %v400 = vunpack.c.l.b16 %v133
  %v401 = vunpack.c.l.b16 %v134
  %v402 = vunpack.c.l.b16 %v135
  %v403 = vunpack.c.l.b16 %v136
  %v404 = vunpack.c.l.b16 %v137
  %v405 = vunpack.c.l.b16 %v138
  %v406 = vunpack.c.l.b16 %v139
  %v407 = vunpack.c.l.b16 %v140
  %v408 = vunpack.c.l.b16 %v141
  %v409 = vunpack.c.l.b16 %v142
  %v410 = vunpack.c.l.b16 %v143
  %v411 = vunpack.c.l.b16 %v144
  %v412 = vunpack.c.l.b16 %v145
  %v413 = vpack.c.b16 %v286, %v285
  %v414 = vpack.c.b16 %v288, %v287
  %v415 = vpack.c.b16 %v290, %v289
  %v416 = vpack.c.b16 %v292, %v291
  %v417 = vpack.c.b16 %v294, %v293
  %v418 = vpack.c.b16 %v296, %v295
  %v419 = vpack.c.b16 %v298, %v297
  %v420 = vpack.c.b16 %v300, %v299
  %v421 = vpack.c.b16 %v302, %v301
  %v422 = vpack.c.b16 %v304, %v303
  %v423 = vpack.c.b16 %v306, %v305
  %v424 = vpack.c.b16 %v308, %v307
  %v425 = vpack.c.b16 %v310, %v309
  %v426 = vpack.c.b16 %v312, %v311
  %v427 = vpack.c.b16 %v314, %v313
  %v428 = vpack.c.b16 %v316, %v315
  %v429 = vpack.c.b16 %v318, %v317
  %v430 = vpack.c.b16 %v320, %v319
  %v431 = vpack.c.b16 %v322, %v321
  %v432 = vpack.c.b16 %v324, %v323
  %v433 = vpack.c.b16 %v326, %v325
  %v434 = vpack.c.b16 %v328, %v327
  %v435 = vpack.c.b16 %v330, %v329
  %v436 = vpack.c.b16 %v332, %v331
  %v437 = vpack.c.b16 %v334, %v333
  %v438 = vpack.c.b16 %v336, %v335
  %v439 = vpack.c.b16 %v338, %v337
  %v440 = vpack.c.b16 %v340, %v339
  %v441 = vpack.c.b16 %v342, %v341
  %v442 = vpack.c.b16 %v344, %v343
  %v443 = vpack.c.b16 %v346, %v345
  %v444 = vpack.c.b16 %v348, %v347
  %v445 = vpack.c.b16 %v350, %v349
  %v446 = vpack.c.b16 %v352, %v351
  %v447 = vpack.c.b16 %v354, %v353
  %v448 = vpack.c.b16 %v356, %v355
  %v449 = vpack.c.b16 %v358, %v357
  %v450 = vpack.c.b16 %v360, %v359
  %v451 = vpack.c.b16 %v362, %v361
  %v452 = vpack.c.b16 %v364, %v363
  %v453 = vpack.c.b16 %v366, %v365
  %v454 = vpack.c.b16 %v368, %v367
  %v455 = vpack.c.b16 %v370, %v369
  %v456 = vpack.c.b16 %v372, %v371
  %v457 = vpack.c.b16 %v374, %v373
  %v458 = vpack.c.b16 %v376, %v375
  %v459 = vpack.c.b16 %v378, %v377
  %v460 = vpack.c.b16 %v380, %v379
  %v461 = vpack.c.b16 %v382, %v381
  %v462 = vpack.c.b16 %v384, %v383
  %v463 = vpack.c.b16 %v386, %v385
  %v464 = vpack.c.b16 %v388, %v387
  %v465 = vpack.c.b16 %v390, %v389
  %v466 = vpack.c.b16 %v392, %v391
  %v467 = vpack.c.b16 %v394, %v393
  %v468 = vpack.c.b16 %v396, %v395
  %v469 = vpack.c.b16 %v398, %v397
  %v470 = vpack.c.b16 %v400, %v399
  %v471 = vpack.c.b16 %v402, %v401
  %v472 = vpack.c.b16 %v404, %v403
  %v473 = vpack.c.b16 %v406, %v405
  %v474 = vpack.c.b16 %v408, %v407
  %v475 = vpack.c.b16 %v410, %v409
  %v476 = vpack.c.b16 %v412, %v411
  %v481 = vunpack.c.l.b16 %v146
  %v482 = vunpack.c.l.b16 %v147
  %v483 = vunpack.c.l.b16 %v148
  %v484 = vunpack.c.l.b16 %v149
  %v485 = vpack.c.b16 %v482, %v481
  %v486 = vpack.c.b16 %v484, %v483
  %vm488 = vcmask 220160
  %v490 = vsel %vm488, %v413, 0
  %v493 = vsel %vm488, %v414, 0
  %v496 = vsel %vm488, %v415, 0
  %v499 = vsel %vm488, %v416, 0
  %v502 = vsel %vm488, %v417, 0
  %v505 = vsel %vm488, %v418, 0
  %v508 = vsel %vm488, %v419, 0
  %v511 = vsel %vm488, %v420, 0
  %v514 = vsel %vm488, %v421, 0
  %v517 = vsel %vm488, %v422, 0
  %v520 = vsel %vm488, %v423, 0
  %v523 = vsel %vm488, %v424, 0
  %v526 = vsel %vm488, %v425, 0
  %v529 = vsel %vm488, %v426, 0
  %v532 = vsel %vm488, %v427, 0
  %v535 = vsel %vm488, %v428, 0
  %v538 = vsel %vm488, %v429, 0
  %v541 = vsel %vm488, %v430, 0
  %v544 = vsel %vm488, %v431, 0
  %v547 = vsel %vm488, %v432, 0
  %v550 = vsel %vm488, %v433, 0
  %v553 = vsel %vm488, %v434, 0
  %v556 = vsel %vm488, %v435, 0
  %v559 = vsel %vm488, %v436, 0
  %v562 = vsel %vm488, %v437, 0
  %v565 = vsel %vm488, %v438, 0
  %v568 = vsel %vm488, %v439, 0
  %v571 = vsel %vm488, %v440, 0
  %v574 = vsel %vm488, %v441, 0
  %v577 = vsel %vm488, %v442, 0
  %v580 = vsel %vm488, %v443, 0
  %v583 = vsel %vm488, %v444, 0
  %v586 = vsel %vm488, %v445, 0
  %v589 = vsel %vm488, %v446, 0
  %v592 = vsel %vm488, %v447, 0
  %v595 = vsel %vm488, %v448, 0
  %v598 = vsel %vm488, %v449, 0
  %v601 = vsel %vm488, %v450, 0
  %v604 = vsel %vm488, %v451, 0
  %v607 = vsel %vm488, %v452, 0
  %v610 = vsel %vm488, %v453, 0
  %v613 = vsel %vm488, %v454, 0
  %v616 = vsel %vm488, %v455, 0
  %v619 = vsel %vm488, %v456, 0
  %v622 = vsel %vm488, %v457, 0
  %v625 = vsel %vm488, %v458, 0
  %v628 = vsel %vm488, %v459, 0
  %v631 = vsel %vm488, %v460, 0
  %v634 = vsel %vm488, %v461, 0
  %v637 = vsel %vm488, %v462, 0
  %v640 = vsel %vm488, %v463, 0
  %v643 = vsel %vm488, %v464, 0
  %v646 = vsel %vm488, %v465, 0
  %v649 = vsel %vm488, %v466, 0
  %v652 = vsel %vm488, %v467, 0
  %v655 = vsel %vm488, %v468, 0
  %v658 = vsel %vm488, %v469, 0
  %v661 = vsel %vm488, %v470, 0
  %v664 = vsel %vm488, %v471, 0
  %v667 = vsel %vm488, %v472, 0
  %v670 = vsel %vm488, %v473, 0
  %v673 = vsel %vm488, %v474, 0
  %v676 = vsel %vm488, %v475, 0
  %v679 = vsel %vm488, %v476, 0
  %vm681 = vcmask 1044480
  %vm682 = vcmask 1045504
  %v683 = vsel %vm681, 4294967295, 65535
  %v684 = vsel %vm682, %v683, 0
  %v686 = vand.u32 %v486, %v684
  %688 = vmatprep.subr.bf16.mxu0 0
  %689 = vmatpush1.bf16.msra.mxu0 %v485
  %690 = vmatprep.subr.bf16.mxu0 0
  %691 = vmatpush1.bf16.msra.mxu0 %v686
  %692 = vmatprep.subr.bf16.mxu0 0
  %693 = vmatpush1.bf16.msra.mxu0 0
  %694 = vmatprep.subr.bf16.mxu0 0
  %695 = vmatpush1.bf16.msra.mxu0 0
  %696 = vmatprep.subr.bf16.mxu0 0
  %697 = vmatpush1.bf16.msra.mxu0 0
  %698 = vmatprep.subr.bf16.mxu0 0
  %699 = vmatpush1.bf16.msra.mxu0 0
  %700 = vmatprep.subr.bf16.mxu0 0
  %701 = vmatpush1.bf16.msra.mxu0 0
  %702 = vmatprep.subr.bf16.mxu0 0
  %703 = vmatpush1.bf16.msra.mxu0 0
  %704 = vmatprep.subr.bf16.mxu0 0
  %705 = vmatpush1.bf16.msra.mxu0 0
  %706 = vmatprep.subr.bf16.mxu0 0
  %707 = vmatpush1.bf16.msra.mxu0 0
  %708 = vmatprep.subr.bf16.mxu0 0
  %709 = vmatpush1.bf16.msra.mxu0 0
  %710 = vmatprep.subr.bf16.mxu0 0
  %711 = vmatpush1.bf16.msra.mxu0 0
  %712 = vmatprep.subr.bf16.mxu0 0
  %713 = vmatpush1.bf16.msra.mxu0 0
  %714 = vmatprep.subr.bf16.mxu0 0
  %715 = vmatpush1.bf16.msra.mxu0 0
  %716 = vmatprep.subr.bf16.mxu0 0
  %717 = vmatpush1.bf16.msra.mxu0 0
  %718 = vmatprep.subr.bf16.mxu0 0
  %719 = vmatpush1.bf16.msra.mxu0 0
  %720 = vmatprep.mubr.bf16.mxu0 0
  %721 = vmatmul.mubr.bf16.gmra.mrb[0].mxu0 %v490
  %v722 = vpop.f32.mrb[0].mxu0
  %v723 = vadd.f32 %v155, %v722
  %v724 = vpop.f32.mrb[0].mxu0
  %v725 = vpop.f32.mrb[0].mxu0
  %v726 = vadd.f32 %v155, %v725
  %v727 = vpop.f32.mrb[0].mxu0
  %728 = vmatprep.mubr.bf16.mxu0 0
  %729 = vmatmul.mubr.bf16.gmra.mrb[0].mxu0 %v493
  %v730 = vpop.f32.mrb[0].mxu0
  %v731 = vadd.f32 %v155, %v730
  %v732 = vpop.f32.mrb[0].mxu0
  %v733 = vpop.f32.mrb[0].mxu0
  %v734 = vadd.f32 %v155, %v733
  %v735 = vpop.f32.mrb[0].mxu0
  %736 = vmatprep.mubr.bf16.mxu0 0
  %737 = vmatmul.mubr.bf16.gmra.mrb[0].mxu0 %v496
  %v738 = vpop.f32.mrb[0].mxu0
  %v739 = vadd.f32 %v155, %v738
  %v740 = vpop.f32.mrb[0].mxu0
  %v741 = vpop.f32.mrb[0].mxu0
  %v742 = vadd.f32 %v155, %v741
  %v743 = vpop.f32.mrb[0].mxu0
  %744 = vmatprep.mubr.bf16.mxu0 0
  %745 = vmatmul.mubr.bf16.gmra.mrb[0].mxu0 %v499
  %v746 = vpop.f32.mrb[0].mxu0
  %v747 = vadd.f32 %v155, %v746
  %v748 = vpop.f32.mrb[0].mxu0
  %v749 = vpop.f32.mrb[0].mxu0
  %v750 = vadd.f32 %v155, %v749
  %v751 = vpop.f32.mrb[0].mxu0
  %752 = vmatprep.mubr.bf16.mxu0 0
  %753 = vmatmul.mubr.bf16.gmra.mrb[0].mxu0 %v502
  %v754 = vpop.f32.mrb[0].mxu0
  %v755 = vadd.f32 %v155, %v754
  %v756 = vpop.f32.mrb[0].mxu0
  %v757 = vpop.f32.mrb[0].mxu0
  %v758 = vadd.f32 %v155, %v757
  %v759 = vpop.f32.mrb[0].mxu0
  %760 = vmatprep.mubr.bf16.mxu0 0
  %761 = vmatmul.mubr.bf16.gmra.mrb[0].mxu0 %v505
  %v762 = vpop.f32.mrb[0].mxu0
  %v763 = vadd.f32 %v155, %v762
  %v764 = vpop.f32.mrb[0].mxu0
  %v765 = vpop.f32.mrb[0].mxu0
  %v766 = vadd.f32 %v155, %v765
  %v767 = vpop.f32.mrb[0].mxu0
  %768 = vmatprep.mubr.bf16.mxu0 0
  %769 = vmatmul.mubr.bf16.gmra.mrb[0].mxu0 %v508
  %v770 = vpop.f32.mrb[0].mxu0
  %v771 = vadd.f32 %v155, %v770
  %v772 = vpop.f32.mrb[0].mxu0
  %v773 = vpop.f32.mrb[0].mxu0
  %v774 = vadd.f32 %v155, %v773
  %v775 = vpop.f32.mrb[0].mxu0
  %776 = vmatprep.mubr.bf16.mxu0 0
  %777 = vmatmul.mubr.bf16.gmra.mrb[0].mxu0 %v511
  %v778 = vpop.f32.mrb[0].mxu0
  %v779 = vadd.f32 %v155, %v778
  %v780 = vpop.f32.mrb[0].mxu0
  %v781 = vpop.f32.mrb[0].mxu0
  %v782 = vadd.f32 %v155, %v781
  %v783 = vpop.f32.mrb[0].mxu0
  %784 = vmatprep.mubr.bf16.mxu0 0
  %785 = vmatmul.mubr.bf16.gmra.mrb[0].mxu0 %v514
  %v786 = vpop.f32.mrb[0].mxu0
  %v787 = vadd.f32 %v155, %v786
  %v788 = vpop.f32.mrb[0].mxu0
  %v789 = vpop.f32.mrb[0].mxu0
  %v790 = vadd.f32 %v155, %v789
  %v791 = vpop.f32.mrb[0].mxu0
  %792 = vmatprep.mubr.bf16.mxu0 0
  %793 = vmatmul.mubr.bf16.gmra.mrb[0].mxu0 %v517
  %v794 = vpop.f32.mrb[0].mxu0
  %v795 = vadd.f32 %v155, %v794
  %v796 = vpop.f32.mrb[0].mxu0
  %v797 = vpop.f32.mrb[0].mxu0
  %v798 = vadd.f32 %v155, %v797
  %v799 = vpop.f32.mrb[0].mxu0
  %800 = vmatprep.mubr.bf16.mxu0 0
  %801 = vmatmul.mubr.bf16.gmra.mrb[0].mxu0 %v520
  %v802 = vpop.f32.mrb[0].mxu0
  %v803 = vadd.f32 %v155, %v802
  %v804 = vpop.f32.mrb[0].mxu0
  %v805 = vpop.f32.mrb[0].mxu0
  %v806 = vadd.f32 %v155, %v805
  %v807 = vpop.f32.mrb[0].mxu0
  %808 = vmatprep.mubr.bf16.mxu0 0
  %809 = vmatmul.mubr.bf16.gmra.mrb[0].mxu0 %v523
  %v810 = vpop.f32.mrb[0].mxu0
  %v811 = vadd.f32 %v155, %v810
  %v812 = vpop.f32.mrb[0].mxu0
  %v813 = vpop.f32.mrb[0].mxu0
  %v814 = vadd.f32 %v155, %v813
  %v815 = vpop.f32.mrb[0].mxu0
  %816 = vmatprep.mubr.bf16.mxu0 0
  %817 = vmatmul.mubr.bf16.gmra.mrb[0].mxu0 %v526
  %v818 = vpop.f32.mrb[0].mxu0
  %v819 = vadd.f32 %v155, %v818
  %v820 = vpop.f32.mrb[0].mxu0
  %v821 = vpop.f32.mrb[0].mxu0
  %v822 = vadd.f32 %v155, %v821
  %v823 = vpop.f32.mrb[0].mxu0
  %824 = vmatprep.mubr.bf16.mxu0 0
  %825 = vmatmul.mubr.bf16.gmra.mrb[0].mxu0 %v529
  %v826 = vpop.f32.mrb[0].mxu0
  %v827 = vadd.f32 %v155, %v826
  %v828 = vpop.f32.mrb[0].mxu0
  %v829 = vpop.f32.mrb[0].mxu0
  %v830 = vadd.f32 %v155, %v829
  %v831 = vpop.f32.mrb[0].mxu0
  %832 = vmatprep.mubr.bf16.mxu0 0
  %833 = vmatmul.mubr.bf16.gmra.mrb[0].mxu0 %v532
  %v834 = vpop.f32.mrb[0].mxu0
  %v835 = vadd.f32 %v155, %v834
  %v836 = vpop.f32.mrb[0].mxu0
  %v837 = vpop.f32.mrb[0].mxu0
  %v838 = vadd.f32 %v155, %v837
  %v839 = vpop.f32.mrb[0].mxu0
  %840 = vmatprep.mubr.bf16.mxu0 0
  %841 = vmatmul.mubr.bf16.gmra.mrb[0].mxu0 %v535
  %v842 = vpop.f32.mrb[0].mxu0
  %v843 = vadd.f32 %v155, %v842
  %v844 = vpop.f32.mrb[0].mxu0
  %v845 = vpop.f32.mrb[0].mxu0
  %v846 = vadd.f32 %v155, %v845
  %v847 = vpop.f32.mrb[0].mxu0
  %848 = vmatprep.mubr.bf16.mxu0 0
  %849 = vmatmul.mubr.bf16.gmra.mrb[0].mxu0 %v538
  %v850 = vpop.f32.mrb[0].mxu0
  %v851 = vadd.f32 %v155, %v850
  %v852 = vpop.f32.mrb[0].mxu0
  %v853 = vpop.f32.mrb[0].mxu0
  %v854 = vadd.f32 %v155, %v853
  %v855 = vpop.f32.mrb[0].mxu0
  %856 = vmatprep.mubr.bf16.mxu0 0
  %857 = vmatmul.mubr.bf16.gmra.mrb[0].mxu0 %v541
  %v858 = vpop.f32.mrb[0].mxu0
  %v859 = vadd.f32 %v155, %v858
  %v860 = vpop.f32.mrb[0].mxu0
  %v861 = vpop.f32.mrb[0].mxu0
  %v862 = vadd.f32 %v155, %v861
  %v863 = vpop.f32.mrb[0].mxu0
  %864 = vmatprep.mubr.bf16.mxu0 0
  %865 = vmatmul.mubr.bf16.gmra.mrb[0].mxu0 %v544
  %v866 = vpop.f32.mrb[0].mxu0
  %v867 = vadd.f32 %v155, %v866
  %v868 = vpop.f32.mrb[0].mxu0
  %v869 = vpop.f32.mrb[0].mxu0
  %v870 = vadd.f32 %v155, %v869
  %v871 = vpop.f32.mrb[0].mxu0
  %872 = vmatprep.mubr.bf16.mxu0 0
  %873 = vmatmul.mubr.bf16.gmra.mrb[0].mxu0 %v547
  %v874 = vpop.f32.mrb[0].mxu0
  %v875 = vadd.f32 %v155, %v874
  %v876 = vpop.f32.mrb[0].mxu0
  %v877 = vpop.f32.mrb[0].mxu0
  %v878 = vadd.f32 %v155, %v877
  %v879 = vpop.f32.mrb[0].mxu0
  %880 = vmatprep.mubr.bf16.mxu0 0
  %881 = vmatmul.mubr.bf16.gmra.mrb[0].mxu0 %v550
  %v882 = vpop.f32.mrb[0].mxu0
  %v883 = vadd.f32 %v155, %v882
  %v884 = vpop.f32.mrb[0].mxu0
  %v885 = vpop.f32.mrb[0].mxu0
  %v886 = vadd.f32 %v155, %v885
  %v887 = vpop.f32.mrb[0].mxu0
  %888 = vmatprep.mubr.bf16.mxu0 0
  %889 = vmatmul.mubr.bf16.gmra.mrb[0].mxu0 %v553
  %v890 = vpop.f32.mrb[0].mxu0
  %v891 = vadd.f32 %v155, %v890
  %v892 = vpop.f32.mrb[0].mxu0
  %v893 = vpop.f32.mrb[0].mxu0
  %v894 = vadd.f32 %v155, %v893
  %v895 = vpop.f32.mrb[0].mxu0
  %896 = vmatprep.mubr.bf16.mxu0 0
  %897 = vmatmul.mubr.bf16.gmra.mrb[0].mxu0 %v556
  %v898 = vpop.f32.mrb[0].mxu0
  %v899 = vadd.f32 %v155, %v898
  %v900 = vpop.f32.mrb[0].mxu0
  %v901 = vpop.f32.mrb[0].mxu0
  %v902 = vadd.f32 %v155, %v901
  %v903 = vpop.f32.mrb[0].mxu0
  %904 = vmatprep.mubr.bf16.mxu0 0
  %905 = vmatmul.mubr.bf16.gmra.mrb[0].mxu0 %v559
  %v906 = vpop.f32.mrb[0].mxu0
  %v907 = vadd.f32 %v155, %v906
  %v908 = vpop.f32.mrb[0].mxu0
  %v909 = vpop.f32.mrb[0].mxu0
  %v910 = vadd.f32 %v155, %v909
  %v911 = vpop.f32.mrb[0].mxu0
  %912 = vmatprep.mubr.bf16.mxu0 0
  %913 = vmatmul.mubr.bf16.gmra.mrb[0].mxu0 %v562
  %v914 = vpop.f32.mrb[0].mxu0
  %v915 = vadd.f32 %v155, %v914
  %v916 = vpop.f32.mrb[0].mxu0
  %v917 = vpop.f32.mrb[0].mxu0
  %v918 = vadd.f32 %v155, %v917
  %v919 = vpop.f32.mrb[0].mxu0
  %920 = vmatprep.mubr.bf16.mxu0 0
  %921 = vmatmul.mubr.bf16.gmra.mrb[0].mxu0 %v565
  %v922 = vpop.f32.mrb[0].mxu0
  %v923 = vadd.f32 %v155, %v922
  %v924 = vpop.f32.mrb[0].mxu0
  %v925 = vpop.f32.mrb[0].mxu0
  %v926 = vadd.f32 %v155, %v925
  %v927 = vpop.f32.mrb[0].mxu0
  %928 = vmatprep.mubr.bf16.mxu0 0
  %929 = vmatmul.mubr.bf16.gmra.mrb[0].mxu0 %v568
  %v930 = vpop.f32.mrb[0].mxu0
  %v931 = vadd.f32 %v155, %v930
  %v932 = vpop.f32.mrb[0].mxu0
  %v933 = vpop.f32.mrb[0].mxu0
  %v934 = vadd.f32 %v155, %v933
  %v935 = vpop.f32.mrb[0].mxu0
  %936 = vmatprep.mubr.bf16.mxu0 0
  %937 = vmatmul.mubr.bf16.gmra.mrb[0].mxu0 %v571
  %v938 = vpop.f32.mrb[0].mxu0
  %v939 = vadd.f32 %v155, %v938
  %v940 = vpop.f32.mrb[0].mxu0
  %v941 = vpop.f32.mrb[0].mxu0
  %v942 = vadd.f32 %v155, %v941
  %v943 = vpop.f32.mrb[0].mxu0
  %944 = vmatprep.mubr.bf16.mxu0 0
  %945 = vmatmul.mubr.bf16.gmra.mrb[0].mxu0 %v574
  %v946 = vpop.f32.mrb[0].mxu0
  %v947 = vadd.f32 %v155, %v946
  %v948 = vpop.f32.mrb[0].mxu0
  %v949 = vpop.f32.mrb[0].mxu0
  %v950 = vadd.f32 %v155, %v949
  %v951 = vpop.f32.mrb[0].mxu0
  %952 = vmatprep.mubr.bf16.mxu0 0
  %953 = vmatmul.mubr.bf16.gmra.mrb[0].mxu0 %v577
  %v954 = vpop.f32.mrb[0].mxu0
  %v955 = vadd.f32 %v155, %v954
  %v956 = vpop.f32.mrb[0].mxu0
  %v957 = vpop.f32.mrb[0].mxu0
  %v958 = vadd.f32 %v155, %v957
  %v959 = vpop.f32.mrb[0].mxu0
  %960 = vmatprep.mubr.bf16.mxu0 0
  %961 = vmatmul.mubr.bf16.gmra.mrb[0].mxu0 %v580
  %v962 = vpop.f32.mrb[0].mxu0
  %v963 = vadd.f32 %v155, %v962
  %v964 = vpop.f32.mrb[0].mxu0
  %v965 = vpop.f32.mrb[0].mxu0
  %v966 = vadd.f32 %v155, %v965
  %v967 = vpop.f32.mrb[0].mxu0
  %968 = vmatprep.mubr.bf16.mxu0 0
  %969 = vmatmul.mubr.bf16.gmra.mrb[0].mxu0 %v583
  %v970 = vpop.f32.mrb[0].mxu0
  %v971 = vadd.f32 %v155, %v970
  %v972 = vpop.f32.mrb[0].mxu0
  %v973 = vpop.f32.mrb[0].mxu0
  %v974 = vadd.f32 %v155, %v973
  %v975 = vpop.f32.mrb[0].mxu0
  %976 = vmatprep.mubr.bf16.mxu0 0
  %977 = vmatmul.mubr.bf16.gmra.mrb[0].mxu0 %v586
  %v978 = vpop.f32.mrb[0].mxu0
  %v979 = vadd.f32 %v155, %v978
  %v980 = vpop.f32.mrb[0].mxu0
  %v981 = vpop.f32.mrb[0].mxu0
  %v982 = vadd.f32 %v155, %v981
  %v983 = vpop.f32.mrb[0].mxu0
  %984 = vmatprep.mubr.bf16.mxu0 0
  %985 = vmatmul.mubr.bf16.gmra.mrb[0].mxu0 %v589
  %v986 = vpop.f32.mrb[0].mxu0
  %v987 = vadd.f32 %v155, %v986
  %v988 = vpop.f32.mrb[0].mxu0
  %v989 = vpop.f32.mrb[0].mxu0
  %v990 = vadd.f32 %v155, %v989
  %v991 = vpop.f32.mrb[0].mxu0
  %992 = vmatprep.mubr.bf16.mxu0 0
  %993 = vmatmul.mubr.bf16.gmra.mrb[0].mxu0 %v592
  %v994 = vpop.f32.mrb[0].mxu0
  %v995 = vadd.f32 %v155, %v994
  %v996 = vpop.f32.mrb[0].mxu0
  %v997 = vpop.f32.mrb[0].mxu0
  %v998 = vadd.f32 %v155, %v997
  %v999 = vpop.f32.mrb[0].mxu0
  %1000 = vmatprep.mubr.bf16.mxu0 0
  %1001 = vmatmul.mubr.bf16.gmra.mrb[0].mxu0 %v595
  %v1002 = vpop.f32.mrb[0].mxu0
  %v1003 = vadd.f32 %v155, %v1002
  %v1004 = vpop.f32.mrb[0].mxu0
  %v1005 = vpop.f32.mrb[0].mxu0
  %v1006 = vadd.f32 %v155, %v1005
  %v1007 = vpop.f32.mrb[0].mxu0
  %1008 = vmatprep.mubr.bf16.mxu0 0
  %1009 = vmatmul.mubr.bf16.gmra.mrb[0].mxu0 %v598
  %v1010 = vpop.f32.mrb[0].mxu0
  %v1011 = vadd.f32 %v155, %v1010
  %v1012 = vpop.f32.mrb[0].mxu0
  %v1013 = vpop.f32.mrb[0].mxu0
  %v1014 = vadd.f32 %v155, %v1013
  %v1015 = vpop.f32.mrb[0].mxu0
  %1016 = vmatprep.mubr.bf16.mxu0 0
  %1017 = vmatmul.mubr.bf16.gmra.mrb[0].mxu0 %v601
  %v1018 = vpop.f32.mrb[0].mxu0
  %v1019 = vadd.f32 %v155, %v1018
  %v1020 = vpop.f32.mrb[0].mxu0
  %v1021 = vpop.f32.mrb[0].mxu0
  %v1022 = vadd.f32 %v155, %v1021
  %v1023 = vpop.f32.mrb[0].mxu0
  %1024 = vmatprep.mubr.bf16.mxu0 0
  %1025 = vmatmul.mubr.bf16.gmra.mrb[0].mxu0 %v604
  %v1026 = vpop.f32.mrb[0].mxu0
  %v1027 = vadd.f32 %v155, %v1026
  %v1028 = vpop.f32.mrb[0].mxu0
  %v1029 = vpop.f32.mrb[0].mxu0
  %v1030 = vadd.f32 %v155, %v1029
  %v1031 = vpop.f32.mrb[0].mxu0
  %1032 = vmatprep.mubr.bf16.mxu0 0
  %1033 = vmatmul.mubr.bf16.gmra.mrb[0].mxu0 %v607
  %v1034 = vpop.f32.mrb[0].mxu0
  %v1035 = vadd.f32 %v155, %v1034
  %v1036 = vpop.f32.mrb[0].mxu0
  %v1037 = vpop.f32.mrb[0].mxu0
  %v1038 = vadd.f32 %v155, %v1037
  %v1039 = vpop.f32.mrb[0].mxu0
  %1040 = vmatprep.mubr.bf16.mxu0 0
  %1041 = vmatmul.mubr.bf16.gmra.mrb[0].mxu0 %v610
  %v1042 = vpop.f32.mrb[0].mxu0
  %v1043 = vadd.f32 %v155, %v1042
  %v1044 = vpop.f32.mrb[0].mxu0
  %v1045 = vpop.f32.mrb[0].mxu0
  %v1046 = vadd.f32 %v155, %v1045
  %v1047 = vpop.f32.mrb[0].mxu0
  %1048 = vmatprep.mubr.bf16.mxu0 0
  %1049 = vmatmul.mubr.bf16.gmra.mrb[0].mxu0 %v613
  %v1050 = vpop.f32.mrb[0].mxu0
  %v1051 = vadd.f32 %v155, %v1050
  %v1052 = vpop.f32.mrb[0].mxu0
  %v1053 = vpop.f32.mrb[0].mxu0
  %v1054 = vadd.f32 %v155, %v1053
  %v1055 = vpop.f32.mrb[0].mxu0
  %1056 = vmatprep.mubr.bf16.mxu0 0
  %1057 = vmatmul.mubr.bf16.gmra.mrb[0].mxu0 %v616
  %v1058 = vpop.f32.mrb[0].mxu0
  %v1059 = vadd.f32 %v155, %v1058
  %v1060 = vpop.f32.mrb[0].mxu0
  %v1061 = vpop.f32.mrb[0].mxu0
  %v1062 = vadd.f32 %v155, %v1061
  %v1063 = vpop.f32.mrb[0].mxu0
  %1064 = vmatprep.mubr.bf16.mxu0 0
  %1065 = vmatmul.mubr.bf16.gmra.mrb[0].mxu0 %v619
  %v1066 = vpop.f32.mrb[0].mxu0
  %v1067 = vadd.f32 %v155, %v1066
  %v1068 = vpop.f32.mrb[0].mxu0
  %v1069 = vpop.f32.mrb[0].mxu0
  %v1070 = vadd.f32 %v155, %v1069
  %v1071 = vpop.f32.mrb[0].mxu0
  %1072 = vmatprep.mubr.bf16.mxu0 0
  %1073 = vmatmul.mubr.bf16.gmra.mrb[0].mxu0 %v622
  %v1074 = vpop.f32.mrb[0].mxu0
  %v1075 = vadd.f32 %v155, %v1074
  %v1076 = vpop.f32.mrb[0].mxu0
  %v1077 = vpop.f32.mrb[0].mxu0
  %v1078 = vadd.f32 %v155, %v1077
  %v1079 = vpop.f32.mrb[0].mxu0
  %1080 = vmatprep.mubr.bf16.mxu0 0
  %1081 = vmatmul.mubr.bf16.gmra.mrb[0].mxu0 %v625
  %v1082 = vpop.f32.mrb[0].mxu0
  %v1083 = vadd.f32 %v155, %v1082
  %v1084 = vpop.f32.mrb[0].mxu0
  %v1085 = vpop.f32.mrb[0].mxu0
  %v1086 = vadd.f32 %v155, %v1085
  %v1087 = vpop.f32.mrb[0].mxu0
  %1088 = vmatprep.mubr.bf16.mxu0 0
  %1089 = vmatmul.mubr.bf16.gmra.mrb[0].mxu0 %v628
  %v1090 = vpop.f32.mrb[0].mxu0
  %v1091 = vadd.f32 %v155, %v1090
  %v1092 = vpop.f32.mrb[0].mxu0
  %v1093 = vpop.f32.mrb[0].mxu0
  %v1094 = vadd.f32 %v155, %v1093
  %v1095 = vpop.f32.mrb[0].mxu0
  %1096 = vmatprep.mubr.bf16.mxu0 0
  %1097 = vmatmul.mubr.bf16.gmra.mrb[0].mxu0 %v631
  %v1098 = vpop.f32.mrb[0].mxu0
  %v1099 = vadd.f32 %v155, %v1098
  %v1100 = vpop.f32.mrb[0].mxu0
  %v1101 = vpop.f32.mrb[0].mxu0
  %v1102 = vadd.f32 %v155, %v1101
  %v1103 = vpop.f32.mrb[0].mxu0
  %1104 = vmatprep.mubr.bf16.mxu0 0
  %1105 = vmatmul.mubr.bf16.gmra.mrb[0].mxu0 %v634
  %v1106 = vpop.f32.mrb[0].mxu0
  %v1107 = vadd.f32 %v155, %v1106
  %v1108 = vpop.f32.mrb[0].mxu0
  %v1109 = vpop.f32.mrb[0].mxu0
  %v1110 = vadd.f32 %v155, %v1109
  %v1111 = vpop.f32.mrb[0].mxu0
  %1112 = vmatprep.mubr.bf16.mxu0 0
  %1113 = vmatmul.mubr.bf16.gmra.mrb[0].mxu0 %v637
  %v1114 = vpop.f32.mrb[0].mxu0
  %v1115 = vadd.f32 %v155, %v1114
  %v1116 = vpop.f32.mrb[0].mxu0
  %v1117 = vpop.f32.mrb[0].mxu0
  %v1118 = vadd.f32 %v155, %v1117
  %v1119 = vpop.f32.mrb[0].mxu0
  %1120 = vmatprep.mubr.bf16.mxu0 0
  %1121 = vmatmul.mubr.bf16.gmra.mrb[0].mxu0 %v640
  %v1122 = vpop.f32.mrb[0].mxu0
  %v1123 = vadd.f32 %v155, %v1122
  %v1124 = vpop.f32.mrb[0].mxu0
  %v1125 = vpop.f32.mrb[0].mxu0
  %v1126 = vadd.f32 %v155, %v1125
  %v1127 = vpop.f32.mrb[0].mxu0
  %1128 = vmatprep.mubr.bf16.mxu0 0
  %1129 = vmatmul.mubr.bf16.gmra.mrb[0].mxu0 %v643
  %v1130 = vpop.f32.mrb[0].mxu0
  %v1131 = vadd.f32 %v155, %v1130
  %v1132 = vpop.f32.mrb[0].mxu0
  %v1133 = vpop.f32.mrb[0].mxu0
  %v1134 = vadd.f32 %v155, %v1133
  %v1135 = vpop.f32.mrb[0].mxu0
  %1136 = vmatprep.mubr.bf16.mxu0 0
  %1137 = vmatmul.mubr.bf16.gmra.mrb[0].mxu0 %v646
  %v1138 = vpop.f32.mrb[0].mxu0
  %v1139 = vadd.f32 %v155, %v1138
  %v1140 = vpop.f32.mrb[0].mxu0
  %v1141 = vpop.f32.mrb[0].mxu0
  %v1142 = vadd.f32 %v155, %v1141
  %v1143 = vpop.f32.mrb[0].mxu0
  %1144 = vmatprep.mubr.bf16.mxu0 0
  %1145 = vmatmul.mubr.bf16.gmra.mrb[0].mxu0 %v649
  %v1146 = vpop.f32.mrb[0].mxu0
  %v1147 = vadd.f32 %v155, %v1146
  %v1148 = vpop.f32.mrb[0].mxu0
  %v1149 = vpop.f32.mrb[0].mxu0
  %v1150 = vadd.f32 %v155, %v1149
  %v1151 = vpop.f32.mrb[0].mxu0
  %1152 = vmatprep.mubr.bf16.mxu0 0
  %1153 = vmatmul.mubr.bf16.gmra.mrb[0].mxu0 %v652
  %v1154 = vpop.f32.mrb[0].mxu0
  %v1155 = vadd.f32 %v155, %v1154
  %v1156 = vpop.f32.mrb[0].mxu0
  %v1157 = vpop.f32.mrb[0].mxu0
  %v1158 = vadd.f32 %v155, %v1157
  %v1159 = vpop.f32.mrb[0].mxu0
  %1160 = vmatprep.mubr.bf16.mxu0 0
  %1161 = vmatmul.mubr.bf16.gmra.mrb[0].mxu0 %v655
  %v1162 = vpop.f32.mrb[0].mxu0
  %v1163 = vadd.f32 %v155, %v1162
  %v1164 = vpop.f32.mrb[0].mxu0
  %v1165 = vpop.f32.mrb[0].mxu0
  %v1166 = vadd.f32 %v155, %v1165
  %v1167 = vpop.f32.mrb[0].mxu0
  %1168 = vmatprep.mubr.bf16.mxu0 0
  %1169 = vmatmul.mubr.bf16.gmra.mrb[0].mxu0 %v658
  %v1170 = vpop.f32.mrb[0].mxu0
  %v1171 = vadd.f32 %v155, %v1170
  %v1172 = vpop.f32.mrb[0].mxu0
  %v1173 = vpop.f32.mrb[0].mxu0
  %v1174 = vadd.f32 %v155, %v1173
  %v1175 = vpop.f32.mrb[0].mxu0
  %1176 = vmatprep.mubr.bf16.mxu0 0
  %1177 = vmatmul.mubr.bf16.gmra.mrb[0].mxu0 %v661
  %v1178 = vpop.f32.mrb[0].mxu0
  %v1179 = vadd.f32 %v155, %v1178
  %v1180 = vpop.f32.mrb[0].mxu0
  %v1181 = vpop.f32.mrb[0].mxu0
  %v1182 = vadd.f32 %v155, %v1181
  %v1183 = vpop.f32.mrb[0].mxu0
  %1184 = vmatprep.mubr.bf16.mxu0 0
  %1185 = vmatmul.mubr.bf16.gmra.mrb[0].mxu0 %v664
  %v1186 = vpop.f32.mrb[0].mxu0
  %v1187 = vadd.f32 %v155, %v1186
  %v1188 = vpop.f32.mrb[0].mxu0
  %v1189 = vpop.f32.mrb[0].mxu0
  %v1190 = vadd.f32 %v155, %v1189
  %v1191 = vpop.f32.mrb[0].mxu0
  %1192 = vmatprep.mubr.bf16.mxu0 0
  %1193 = vmatmul.mubr.bf16.gmra.mrb[0].mxu0 %v667
  %v1194 = vpop.f32.mrb[0].mxu0
  %v1195 = vadd.f32 %v155, %v1194
  %v1196 = vpop.f32.mrb[0].mxu0
  %v1197 = vpop.f32.mrb[0].mxu0
  %v1198 = vadd.f32 %v155, %v1197
  %v1199 = vpop.f32.mrb[0].mxu0
  %1200 = vmatprep.mubr.bf16.mxu0 0
  %1201 = vmatmul.mubr.bf16.gmra.mrb[0].mxu0 %v670
  %v1202 = vpop.f32.mrb[0].mxu0
  %v1203 = vadd.f32 %v155, %v1202
  %v1204 = vpop.f32.mrb[0].mxu0
  %v1205 = vpop.f32.mrb[0].mxu0
  %v1206 = vadd.f32 %v155, %v1205
  %v1207 = vpop.f32.mrb[0].mxu0
  %1208 = vmatprep.mubr.bf16.mxu0 0
  %1209 = vmatmul.mubr.bf16.gmra.mrb[0].mxu0 %v673
  %v1210 = vpop.f32.mrb[0].mxu0
  %v1211 = vadd.f32 %v155, %v1210
  %v1212 = vpop.f32.mrb[0].mxu0
  %v1213 = vpop.f32.mrb[0].mxu0
  %v1214 = vadd.f32 %v155, %v1213
  %v1215 = vpop.f32.mrb[0].mxu0
  %1216 = vmatprep.mubr.bf16.mxu0 0
  %1217 = vmatmul.mubr.bf16.gmra.mrb[0].mxu0 %v676
  %v1218 = vpop.f32.mrb[0].mxu0
  %v1219 = vadd.f32 %v155, %v1218
  %v1220 = vpop.f32.mrb[0].mxu0
  %v1221 = vpop.f32.mrb[0].mxu0
  %v1222 = vadd.f32 %v155, %v1221
  %v1223 = vpop.f32.mrb[0].mxu0
  %1224 = vmatprep.mubr.bf16.mxu0 0
  %1225 = vmatmul.mubr.bf16.gmra.mrb[0].mxu0 %v679
  %v1226 = vpop.f32.mrb[0].mxu0
  %v1227 = vadd.f32 %v155, %v1226
  %v1228 = vpop.f32.mrb[0].mxu0
  %v1229 = vpop.f32.mrb[0].mxu0
  %v1230 = vadd.f32 %v155, %v1229
  %v1231 = vpop.f32.mrb[0].mxu0
  %1232 = vdwg.mxu0
  %v1233 = vmax.f32 %v723, 0.0
  %v1234 = vmax.f32 %v726, 0.0
  %v1235 = vmax.f32 %v731, 0.0
  %v1236 = vmax.f32 %v734, 0.0
  %v1237 = vmax.f32 %v739, 0.0
  %v1238 = vmax.f32 %v742, 0.0
  %v1239 = vmax.f32 %v747, 0.0
  %v1240 = vmax.f32 %v750, 0.0
  %v1241 = vmax.f32 %v755, 0.0
  %v1242 = vmax.f32 %v758, 0.0
  %v1243 = vmax.f32 %v763, 0.0
  %v1244 = vmax.f32 %v766, 0.0
  %v1245 = vmax.f32 %v771, 0.0
  %v1246 = vmax.f32 %v774, 0.0
  %v1247 = vmax.f32 %v779, 0.0
  %v1248 = vmax.f32 %v782, 0.0
  %v1249 = vmax.f32 %v787, 0.0
  %v1250 = vmax.f32 %v790, 0.0
  %v1251 = vmax.f32 %v795, 0.0
  %v1252 = vmax.f32 %v798, 0.0
  %v1253 = vmax.f32 %v803, 0.0
  %v1254 = vmax.f32 %v806, 0.0
  %v1255 = vmax.f32 %v811, 0.0
  %v1256 = vmax.f32 %v814, 0.0
  %v1257 = vmax.f32 %v819, 0.0
  %v1258 = vmax.f32 %v822, 0.0
  %v1259 = vmax.f32 %v827, 0.0
  %v1260 = vmax.f32 %v830, 0.0
  %v1261 = vmax.f32 %v835, 0.0
  %v1262 = vmax.f32 %v838, 0.0
  %v1263 = vmax.f32 %v843, 0.0
  %v1264 = vmax.f32 %v846, 0.0
  %v1265 = vmax.f32 %v851, 0.0
  %v1266 = vmax.f32 %v854, 0.0
  %v1267 = vmax.f32 %v859, 0.0
  %v1268 = vmax.f32 %v862, 0.0
  %v1269 = vmax.f32 %v867, 0.0
  %v1270 = vmax.f32 %v870, 0.0
  %v1271 = vmax.f32 %v875, 0.0
  %v1272 = vmax.f32 %v878, 0.0
  %v1273 = vmax.f32 %v883, 0.0
  %v1274 = vmax.f32 %v886, 0.0
  %v1275 = vmax.f32 %v891, 0.0
  %v1276 = vmax.f32 %v894, 0.0
  %v1277 = vmax.f32 %v899, 0.0
  %v1278 = vmax.f32 %v902, 0.0
  %v1279 = vmax.f32 %v907, 0.0
  %v1280 = vmax.f32 %v910, 0.0
  %v1281 = vmax.f32 %v915, 0.0
  %v1282 = vmax.f32 %v918, 0.0
  %v1283 = vmax.f32 %v923, 0.0
  %v1284 = vmax.f32 %v926, 0.0
  %v1285 = vmax.f32 %v931, 0.0
  %v1286 = vmax.f32 %v934, 0.0
  %v1287 = vmax.f32 %v939, 0.0
  %v1288 = vmax.f32 %v942, 0.0
  %v1289 = vmax.f32 %v947, 0.0
  %v1290 = vmax.f32 %v950, 0.0
  %v1291 = vmax.f32 %v955, 0.0
  %v1292 = vmax.f32 %v958, 0.0
  %v1293 = vmax.f32 %v963, 0.0
  %v1294 = vmax.f32 %v966, 0.0
  %v1295 = vmax.f32 %v971, 0.0
  %v1296 = vmax.f32 %v974, 0.0
  %v1297 = vmax.f32 %v979, 0.0
  %v1298 = vmax.f32 %v982, 0.0
  %v1299 = vmax.f32 %v987, 0.0
  %v1300 = vmax.f32 %v990, 0.0
  %v1301 = vmax.f32 %v995, 0.0
  %v1302 = vmax.f32 %v998, 0.0
  %v1303 = vmax.f32 %v1003, 0.0
  %v1304 = vmax.f32 %v1006, 0.0
  %v1305 = vmax.f32 %v1011, 0.0
  %v1306 = vmax.f32 %v1014, 0.0
  %v1307 = vmax.f32 %v1019, 0.0
  %v1308 = vmax.f32 %v1022, 0.0
  %v1309 = vmax.f32 %v1027, 0.0
  %v1310 = vmax.f32 %v1030, 0.0
  %v1311 = vmax.f32 %v1035, 0.0
  %v1312 = vmax.f32 %v1038, 0.0
  %v1313 = vmax.f32 %v1043, 0.0
  %v1314 = vmax.f32 %v1046, 0.0
  %v1315 = vmax.f32 %v1051, 0.0
  %v1316 = vmax.f32 %v1054, 0.0
  %v1317 = vmax.f32 %v1059, 0.0
  %v1318 = vmax.f32 %v1062, 0.0
  %v1319 = vmax.f32 %v1067, 0.0
  %v1320 = vmax.f32 %v1070, 0.0
  %v1321 = vmax.f32 %v1075, 0.0
  %v1322 = vmax.f32 %v1078, 0.0
  %v1323 = vmax.f32 %v1083, 0.0
  %v1324 = vmax.f32 %v1086, 0.0
  %v1325 = vmax.f32 %v1091, 0.0
  %v1326 = vmax.f32 %v1094, 0.0
  %v1327 = vmax.f32 %v1099, 0.0
  %v1328 = vmax.f32 %v1102, 0.0
  %v1329 = vmax.f32 %v1107, 0.0
  %v1330 = vmax.f32 %v1110, 0.0
  %v1331 = vmax.f32 %v1115, 0.0
  %v1332 = vmax.f32 %v1118, 0.0
  %v1333 = vmax.f32 %v1123, 0.0
  %v1334 = vmax.f32 %v1126, 0.0
  %v1335 = vmax.f32 %v1131, 0.0
  %v1336 = vmax.f32 %v1134, 0.0
  %v1337 = vmax.f32 %v1139, 0.0
  %v1338 = vmax.f32 %v1142, 0.0
  %v1339 = vmax.f32 %v1147, 0.0
  %v1340 = vmax.f32 %v1150, 0.0
  %v1341 = vmax.f32 %v1155, 0.0
  %v1342 = vmax.f32 %v1158, 0.0
  %v1343 = vmax.f32 %v1163, 0.0
  %v1344 = vmax.f32 %v1166, 0.0
  %v1345 = vmax.f32 %v1171, 0.0
  %v1346 = vmax.f32 %v1174, 0.0
  %v1347 = vmax.f32 %v1179, 0.0
  %v1348 = vmax.f32 %v1182, 0.0
  %v1349 = vmax.f32 %v1187, 0.0
  %v1350 = vmax.f32 %v1190, 0.0
  %v1351 = vmax.f32 %v1195, 0.0
  %v1352 = vmax.f32 %v1198, 0.0
  %v1353 = vmax.f32 %v1203, 0.0
  %v1354 = vmax.f32 %v1206, 0.0
  %v1355 = vmax.f32 %v1211, 0.0
  %v1356 = vmax.f32 %v1214, 0.0
  %v1357 = vmax.f32 %v1219, 0.0
  %v1358 = vmax.f32 %v1222, 0.0
  %v1359 = vmax.f32 %v1227, 0.0
  %v1360 = vmax.f32 %v1230, 0.0
  %v1361 = vld [vmem:[%s3] sm:$0xff]
  %v1362 = vld [vmem:[%s3 + $0x8] sm:$0xff]
  %v1363 = vpack.c.bf16 %v1234, %v1233
  %v1364 = vpack.c.bf16 %v1236, %v1235
  %v1365 = vpack.c.bf16 %v1238, %v1237
  %v1366 = vpack.c.bf16 %v1240, %v1239
  %v1367 = vpack.c.bf16 %v1242, %v1241
  %v1368 = vpack.c.bf16 %v1244, %v1243
  %v1369 = vpack.c.bf16 %v1246, %v1245
  %v1370 = vpack.c.bf16 %v1248, %v1247
  %v1371 = vpack.c.bf16 %v1250, %v1249
  %v1372 = vpack.c.bf16 %v1252, %v1251
  %v1373 = vpack.c.bf16 %v1254, %v1253
  %v1374 = vpack.c.bf16 %v1256, %v1255
  %v1375 = vpack.c.bf16 %v1258, %v1257
  %v1376 = vpack.c.bf16 %v1260, %v1259
  %v1377 = vpack.c.bf16 %v1262, %v1261
  %v1378 = vpack.c.bf16 %v1264, %v1263
  %v1379 = vpack.c.bf16 %v1266, %v1265
  %v1380 = vpack.c.bf16 %v1268, %v1267
  %v1381 = vpack.c.bf16 %v1270, %v1269
  %v1382 = vpack.c.bf16 %v1272, %v1271
  %v1383 = vpack.c.bf16 %v1274, %v1273
  %v1384 = vpack.c.bf16 %v1276, %v1275
  %v1385 = vpack.c.bf16 %v1278, %v1277
  %v1386 = vpack.c.bf16 %v1280, %v1279
  %v1387 = vpack.c.bf16 %v1282, %v1281
  %v1388 = vpack.c.bf16 %v1284, %v1283
  %v1389 = vpack.c.bf16 %v1286, %v1285
  %v1390 = vpack.c.bf16 %v1288, %v1287
  %v1391 = vpack.c.bf16 %v1290, %v1289
  %v1392 = vpack.c.bf16 %v1292, %v1291
  %v1393 = vpack.c.bf16 %v1294, %v1293
  %v1394 = vpack.c.bf16 %v1296, %v1295
  %v1395 = vpack.c.bf16 %v1298, %v1297
  %v1396 = vpack.c.bf16 %v1300, %v1299
  %v1397 = vpack.c.bf16 %v1302, %v1301
  %v1398 = vpack.c.bf16 %v1304, %v1303
  %v1399 = vpack.c.bf16 %v1306, %v1305
  %v1400 = vpack.c.bf16 %v1308, %v1307
  %v1401 = vpack.c.bf16 %v1310, %v1309
  %v1402 = vpack.c.bf16 %v1312, %v1311
  %v1403 = vpack.c.bf16 %v1314, %v1313
  %v1404 = vpack.c.bf16 %v1316, %v1315
  %v1405 = vpack.c.bf16 %v1318, %v1317
  %v1406 = vpack.c.bf16 %v1320, %v1319
  %v1407 = vpack.c.bf16 %v1322, %v1321
  %v1408 = vpack.c.bf16 %v1324, %v1323
  %v1409 = vpack.c.bf16 %v1326, %v1325
  %v1410 = vpack.c.bf16 %v1328, %v1327
  %v1411 = vpack.c.bf16 %v1330, %v1329
  %v1412 = vpack.c.bf16 %v1332, %v1331
  %v1413 = vpack.c.bf16 %v1334, %v1333
  %v1414 = vpack.c.bf16 %v1336, %v1335
  %v1415 = vpack.c.bf16 %v1338, %v1337
  %v1416 = vpack.c.bf16 %v1340, %v1339
  %v1417 = vpack.c.bf16 %v1342, %v1341
  %v1418 = vpack.c.bf16 %v1344, %v1343
  %v1419 = vpack.c.bf16 %v1346, %v1345
  %v1420 = vpack.c.bf16 %v1348, %v1347
  %v1421 = vpack.c.bf16 %v1350, %v1349
  %v1422 = vpack.c.bf16 %v1352, %v1351
  %v1423 = vpack.c.bf16 %v1354, %v1353
  %v1424 = vpack.c.bf16 %v1356, %v1355
  %v1425 = vpack.c.bf16 %v1358, %v1357
  %v1426 = vpack.c.bf16 %v1360, %v1359
  %v1429 = vcombine.high %v1361, %v1361
  %v1431 = vunpack.c.l.s4 1983009808
  %v1432 = vunpack.c.0.s8 %v1431
  %v1433 = vlaneseq
  %v1434 = vshrl.u32 %v1433, 7
  %v1435 = vsub.s32 %v1432, %v1434
  %v1436 = vrot.slane %v1361, %v1435
  %v1438 = vunpack.c.l.s4 1983009808
  %v1439 = vunpack.c.0.s8 %v1438
  %v1440 = vlaneseq
  %v1441 = vshrl.u32 %v1440, 7
  %v1442 = vsub.s32 %v1439, %v1441
  %v1443 = vrot.slane %v1429, %v1442
  %v1444 = vcombine.high %v1436, %v1436
  %v1445 = vcombine.high %v1443, %v1443
  %v1446 = vcombine.high %v1362, %v1362
  %v1448 = vunpack.c.l.s4 1983009808
  %v1449 = vunpack.c.0.s8 %v1448
  %v1450 = vlaneseq
  %v1451 = vshrl.u32 %v1450, 7
  %v1452 = vsub.s32 %v1449, %v1451
  %v1453 = vrot.slane %v1362, %v1452
  %v1455 = vunpack.c.l.s4 1983009808
  %v1456 = vunpack.c.0.s8 %v1455
  %v1457 = vlaneseq
  %v1458 = vshrl.u32 %v1457, 7
  %v1459 = vsub.s32 %v1456, %v1458
  %v1460 = vrot.slane %v1446, %v1459
  %v1461 = vcombine.high %v1453, %v1453
  %v1462 = vcombine.high %v1460, %v1460
  %1471 = vmatprep.subr.bf16.mxu0 0
  %1472 = vmatpush1.bf16.msra.mxu0 %v1363
  %1473 = vmatprep.subr.bf16.mxu0 0
  %1474 = vmatpush1.bf16.msra.mxu0 %v1364
  %1475 = vmatprep.subr.bf16.mxu0 0
  %1476 = vmatpush1.bf16.msra.mxu0 %v1365
  %1477 = vmatprep.subr.bf16.mxu0 0
  %1478 = vmatpush1.bf16.msra.mxu0 %v1366
  %1479 = vmatprep.subr.bf16.mxu0 0
  %1480 = vmatpush1.bf16.msra.mxu0 %v1367
  %1481 = vmatprep.subr.bf16.mxu0 0
  %1482 = vmatpush1.bf16.msra.mxu0 %v1368
  %1483 = vmatprep.subr.bf16.mxu0 0
  %1484 = vmatpush1.bf16.msra.mxu0 %v1369
  %1485 = vmatprep.subr.bf16.mxu0 0
  %1486 = vmatpush1.bf16.msra.mxu0 %v1370
  %1487 = vmatprep.subr.bf16.mxu0 0
  %1488 = vmatpush1.bf16.msra.mxu0 %v1371
  %1489 = vmatprep.subr.bf16.mxu0 0
  %1490 = vmatpush1.bf16.msra.mxu0 %v1372
  %1491 = vmatprep.subr.bf16.mxu0 0
  %1492 = vmatpush1.bf16.msra.mxu0 %v1373
  %1493 = vmatprep.subr.bf16.mxu0 0
  %1494 = vmatpush1.bf16.msra.mxu0 %v1374
  %1495 = vmatprep.subr.bf16.mxu0 0
  %1496 = vmatpush1.bf16.msra.mxu0 %v1375
  %1497 = vmatprep.subr.bf16.mxu0 0
  %1498 = vmatpush1.bf16.msra.mxu0 %v1376
  %1499 = vmatprep.subr.bf16.mxu0 0
  %1500 = vmatpush1.bf16.msra.mxu0 %v1377
  %1501 = vmatprep.subr.bf16.mxu0 0
  %1502 = vmatpush1.bf16.msra.mxu0 %v1378
  %1503 = vmatprep.mubr.bf16.mxu0 %v1444
  %1504 = vmatmul.mubr.bf16.gmra.mrb[0].mxu0 %v1436
  %v1505 = vpop.f32.mrb[0].mxu0
  %v1506 = vadd.f32 0.0, %v1505
  %v1507 = vpop.f32.mrb[0].mxu0
  %v1508 = vpop.f32.mrb[0].mxu0
  %v1509 = vpop.f32.mrb[0].mxu0
  %1510 = vdwg.mxu0
  %1511 = vmatprep.subr.bf16.mxu0 0
  %1512 = vmatpush1.bf16.msra.mxu0 %v1379
  %1513 = vmatprep.subr.bf16.mxu0 0
  %1514 = vmatpush1.bf16.msra.mxu0 %v1380
  %1515 = vmatprep.subr.bf16.mxu0 0
  %1516 = vmatpush1.bf16.msra.mxu0 %v1381
  %1517 = vmatprep.subr.bf16.mxu0 0
  %1518 = vmatpush1.bf16.msra.mxu0 %v1382
  %1519 = vmatprep.subr.bf16.mxu0 0
  %1520 = vmatpush1.bf16.msra.mxu0 %v1383
  %1521 = vmatprep.subr.bf16.mxu0 0
  %1522 = vmatpush1.bf16.msra.mxu0 %v1384
  %1523 = vmatprep.subr.bf16.mxu0 0
  %1524 = vmatpush1.bf16.msra.mxu0 %v1385
  %1525 = vmatprep.subr.bf16.mxu0 0
  %1526 = vmatpush1.bf16.msra.mxu0 %v1386
  %1527 = vmatprep.subr.bf16.mxu0 0
  %1528 = vmatpush1.bf16.msra.mxu0 %v1387
  %1529 = vmatprep.subr.bf16.mxu0 0
  %1530 = vmatpush1.bf16.msra.mxu0 %v1388
  %1531 = vmatprep.subr.bf16.mxu0 0
  %1532 = vmatpush1.bf16.msra.mxu0 %v1389
  %1533 = vmatprep.subr.bf16.mxu0 0
  %1534 = vmatpush1.bf16.msra.mxu0 %v1390
  %1535 = vmatprep.subr.bf16.mxu0 0
  %1536 = vmatpush1.bf16.msra.mxu0 %v1391
  %1537 = vmatprep.subr.bf16.mxu0 0
  %1538 = vmatpush1.bf16.msra.mxu0 %v1392
  %1539 = vmatprep.subr.bf16.mxu0 0
  %1540 = vmatpush1.bf16.msra.mxu0 %v1393
  %1541 = vmatprep.subr.bf16.mxu0 0
  %1542 = vmatpush1.bf16.msra.mxu0 %v1394
  %1543 = vmatprep.mubr.bf16.mxu0 %v1445
  %1544 = vmatmul.mubr.bf16.gmra.mrb[0].mxu0 %v1443
  %v1545 = vpop.f32.mrb[0].mxu0
  %v1546 = vadd.f32 %v1506, %v1545
  %v1547 = vpop.f32.mrb[0].mxu0
  %v1548 = vpop.f32.mrb[0].mxu0
  %v1549 = vpop.f32.mrb[0].mxu0
  %1550 = vdwg.mxu0
  %1551 = vmatprep.subr.bf16.mxu0 0
  %1552 = vmatpush1.bf16.msra.mxu0 %v1395
  %1553 = vmatprep.subr.bf16.mxu0 0
  %1554 = vmatpush1.bf16.msra.mxu0 %v1396
  %1555 = vmatprep.subr.bf16.mxu0 0
  %1556 = vmatpush1.bf16.msra.mxu0 %v1397
  %1557 = vmatprep.subr.bf16.mxu0 0
  %1558 = vmatpush1.bf16.msra.mxu0 %v1398
  %1559 = vmatprep.subr.bf16.mxu0 0
  %1560 = vmatpush1.bf16.msra.mxu0 %v1399
  %1561 = vmatprep.subr.bf16.mxu0 0
  %1562 = vmatpush1.bf16.msra.mxu0 %v1400
  %1563 = vmatprep.subr.bf16.mxu0 0
  %1564 = vmatpush1.bf16.msra.mxu0 %v1401
  %1565 = vmatprep.subr.bf16.mxu0 0
  %1566 = vmatpush1.bf16.msra.mxu0 %v1402
  %1567 = vmatprep.subr.bf16.mxu0 0
  %1568 = vmatpush1.bf16.msra.mxu0 %v1403
  %1569 = vmatprep.subr.bf16.mxu0 0
  %1570 = vmatpush1.bf16.msra.mxu0 %v1404
  %1571 = vmatprep.subr.bf16.mxu0 0
  %1572 = vmatpush1.bf16.msra.mxu0 %v1405
  %1573 = vmatprep.subr.bf16.mxu0 0
  %1574 = vmatpush1.bf16.msra.mxu0 %v1406
  %1575 = vmatprep.subr.bf16.mxu0 0
  %1576 = vmatpush1.bf16.msra.mxu0 %v1407
  %1577 = vmatprep.subr.bf16.mxu0 0
  %1578 = vmatpush1.bf16.msra.mxu0 %v1408
  %1579 = vmatprep.subr.bf16.mxu0 0
  %1580 = vmatpush1.bf16.msra.mxu0 %v1409
  %1581 = vmatprep.subr.bf16.mxu0 0
  %1582 = vmatpush1.bf16.msra.mxu0 %v1410
  %1583 = vmatprep.mubr.bf16.mxu0 %v1461
  %1584 = vmatmul.mubr.bf16.gmra.mrb[0].mxu0 %v1453
  %v1585 = vpop.f32.mrb[0].mxu0
  %v1586 = vadd.f32 %v1546, %v1585
  %v1587 = vpop.f32.mrb[0].mxu0
  %v1588 = vpop.f32.mrb[0].mxu0
  %v1589 = vpop.f32.mrb[0].mxu0
  %1590 = vdwg.mxu0
  %1591 = vmatprep.subr.bf16.mxu0 0
  %1592 = vmatpush1.bf16.msra.mxu0 %v1411
  %1593 = vmatprep.subr.bf16.mxu0 0
  %1594 = vmatpush1.bf16.msra.mxu0 %v1412
  %1595 = vmatprep.subr.bf16.mxu0 0
  %1596 = vmatpush1.bf16.msra.mxu0 %v1413
  %1597 = vmatprep.subr.bf16.mxu0 0
  %1598 = vmatpush1.bf16.msra.mxu0 %v1414
  %1599 = vmatprep.subr.bf16.mxu0 0
  %1600 = vmatpush1.bf16.msra.mxu0 %v1415
  %1601 = vmatprep.subr.bf16.mxu0 0
  %1602 = vmatpush1.bf16.msra.mxu0 %v1416
  %1603 = vmatprep.subr.bf16.mxu0 0
  %1604 = vmatpush1.bf16.msra.mxu0 %v1417
  %1605 = vmatprep.subr.bf16.mxu0 0
  %1606 = vmatpush1.bf16.msra.mxu0 %v1418
  %1607 = vmatprep.subr.bf16.mxu0 0
  %1608 = vmatpush1.bf16.msra.mxu0 %v1419
  %1609 = vmatprep.subr.bf16.mxu0 0
  %1610 = vmatpush1.bf16.msra.mxu0 %v1420
  %1611 = vmatprep.subr.bf16.mxu0 0
  %1612 = vmatpush1.bf16.msra.mxu0 %v1421
  %1613 = vmatprep.subr.bf16.mxu0 0
  %1614 = vmatpush1.bf16.msra.mxu0 %v1422
  %1615 = vmatprep.subr.bf16.mxu0 0
  %1616 = vmatpush1.bf16.msra.mxu0 %v1423
  %1617 = vmatprep.subr.bf16.mxu0 0
  %1618 = vmatpush1.bf16.msra.mxu0 %v1424
  %1619 = vmatprep.subr.bf16.mxu0 0
  %1620 = vmatpush1.bf16.msra.mxu0 %v1425
  %1621 = vmatprep.subr.bf16.mxu0 0
  %1622 = vmatpush1.bf16.msra.mxu0 %v1426
  %1623 = vmatprep.mubr.bf16.mxu0 %v1462
  %1624 = vmatmul.mubr.bf16.gmra.mrb[0].mxu0 %v1460
  %v1625 = vpop.f32.mrb[0].mxu0
  %v1626 = vadd.f32 %v1586, %v1625
  %v1627 = vpop.f32.mrb[0].mxu0
  %v1628 = vpop.f32.mrb[0].mxu0
  %v1629 = vpop.f32.mrb[0].mxu0
  %1630 = vdwg.mxu0
  %vm1631 = vcmask 257024
  %1632 = vst.msk [vmem:[%s4] sm:$0xf] %vm1631, %v1626
  // Predicated region
  $region18: #{double_net_forward.1} parent=0 // pred_check
    _
  $region19: #{double_net_forward.1} parent=0 // pred_check_branch
    %1634 = sbr.rel (0) target = $region21
  $region20: #{double_net_forward.1} parent=0 // pred_region
    _
  $region21: #{double_net_forward.1} parent=0 // pred_fallthru
    _
  // Predicated region
  $region22: #{double_net_forward.1} parent=0 // pred_check
    _
  $region23: #{double_net_forward.1} parent=0 // pred_check_branch
    %1636 = sbr.rel (0) target = $region25
  $region24: #{double_net_forward.1} parent=0 // pred_region
    _
  $region25: #{double_net_forward.1} parent=0 // pred_fallthru
    _

</llo_original>
